<compile_context>
chip_gen: v6e
topology: v6e:2x2x1
jax: 0.10.0
libtpu: 0.0.40
codegen_flags: <defaults>
</compile_context>

<pallas_src>
import functools

import jax
import jax.numpy as jnp
from jax.experimental import pallas as pl
from jax.experimental.pallas import tpu as pltpu


def _round_up(x, m):
    return (x + m - 1) // m * m


def _vmem_capacity_bytes():
    """Physical VMEM of the local TPU; conservative 64 MiB (v7x) fallback."""
    try:
        info = pltpu.get_tpu_info()
        cap = getattr(info, "vmem_capacity_bytes", None)
        if cap:
            return int(cap)
    except Exception:
        pass
    return 64 << 20


def _layernorm_f32(x, gamma, beta, d_true):
    """LayerNorm over the true feature dim (padded lanes masked), f32 stats."""
    x = x.astype(jnp.float32)
    inv_d = 1.0 / d_true
    mean = jnp.sum(x, axis=-1, keepdims=True) * inv_d
    xc = x - mean
    if x.shape[-1] != d_true:
        lane = jax.lax.broadcasted_iota(jnp.int32, x.shape, 1)
        xc = jnp.where(lane < d_true, xc, 0.0)
    var = jnp.sum(xc * xc, axis=-1, keepdims=True) * inv_d
    inv = jax.lax.rsqrt(var + 1e-5)
    return xc * inv * gamma.astype(jnp.float32) + beta.astype(jnp.float32)


# ----------------------------------------------------------------------------
# Kernels
# ----------------------------------------------------------------------------
def _ffn_resident_kernel(x_ref, g_ref, be_ref, w1_ref, b1_ref, w2_ref, b2_ref,
                         o_ref, *, d_true):
    """Fully fused LN -> Linear1 -> Swish -> Linear2; weights VMEM-resident."""
    xn = _layernorm_f32(x_ref[...], g_ref[...], be_ref[...], d_true)
    h = jnp.dot(xn.astype(w1_ref.dtype), w1_ref[...],
                preferred_element_type=jnp.float32)
    h = h + b1_ref[...].astype(jnp.float32)
    h = h * jax.nn.sigmoid(h)                       # Swish (drop1 = identity)
    y = jnp.dot(h.astype(w2_ref.dtype), w2_ref[...],
                preferred_element_type=jnp.float32)
    y = y + b2_ref[...].astype(jnp.float32)         # drop2 = identity
    o_ref[...] = y.astype(o_ref.dtype)


def _ffn_tiled_kernel(x_ref, g_ref, be_ref, w1_ref, b1_ref, w2_ref, b2_ref,
                      o_ref, xn_ref, acc_ref, *, d_true):
    """Fallback for very large D*H: hidden axis k is the reduction axis."""
    k = pl.program_id(1)
    nk = pl.num_programs(1)

    @pl.when(k == 0)
    def _init():
        xn = _layernorm_f32(x_ref[...], g_ref[...], be_ref[...], d_true)
        xn_ref[...] = xn.astype(xn_ref.dtype)        # bf16 cache for the MXU
        acc_ref[...] = jnp.zeros_like(acc_ref)

    h = jnp.dot(xn_ref[...], w1_ref[...], preferred_element_type=jnp.float32)
    h = h + b1_ref[...].astype(jnp.float32)
    h = h * jax.nn.sigmoid(h)                        # Swish (elementwise in H)
    acc_ref[...] += jnp.dot(h.astype(w2_ref.dtype), w2_ref[...],
                            preferred_element_type=jnp.float32)

    @pl.when(k == nk - 1)
    def _finalize():
        y = acc_ref[...] + b2_ref[...].astype(jnp.float32)
        o_ref[...] = y.astype(o_ref.dtype)


# ----------------------------------------------------------------------------
# Planning / packing / wrapper
# ----------------------------------------------------------------------------
def _plan(D, H, row_tile, hidden_tile):
    """Generation-aware, M-independent tiling plan."""
    Dp = _round_up(D, 128)
    Hp = _round_up(H, 128)
    cap = _vmem_capacity_bytes()
    if cap <= (64 << 20):                 # v7x-class: 64 MiB physical VMEM
        cap_target = max(cap - (8 << 20), 32 << 20)   # leave Mosaic headroom
        tm_resident, tm_tiled = 512, 512              # ~310 flop/byte crossover
    else:                                 # v5e / v6e: 128 MiB physical VMEM
        cap_target = int(cap * 0.85)
        tm_resident, tm_tiled = 512, 768              # v6e crossover ~640-720

    # --- resident-weight plan: W1/W2 DMA'd once, grid = row tiles only ---
    tm = _round_up(row_tile, 128) if row_tile else tm_resident

    def resident_bytes(tm_):
        return (2 * tm_ * Dp * 4 + 2 * tm_ * Dp * 4       # x / out tiles (<=f32)
                + 2 * (Dp * Hp + Hp * Dp) * 2             # W1/W2 bf16 (dbl-buf)
                + 2 * (Hp + 3 * Dp) * 4                   # gamma/beta/b1/b2
                + tm_ * Hp * 4 + tm_ * Dp * 8)            # f32 temporaries

    while tm > 128 and resident_bytes(tm) > cap_target:
        tm //= 2
    if resident_bytes(tm) <= cap_target:
        return dict(resident=True, tm=tm, th=Hp, Dp=Dp, Hp=Hp,
                    cap_target=cap_target)

    # --- tiled-weight fallback (weights don't fit): stream hidden tiles ---
    tm = _round_up(row_tile, 128) if row_tile else tm_tiled
    th = _round_up(min(hidden_tile or 512, Hp), 128)
    Hp = _round_up(Hp, th)                # padded hidden cols are inert zeros
    return dict(resident=False, tm=tm, th=th, Dp=Dp, Hp=Hp,
                cap_target=cap_target)


def _pack_params(gamma, beta, w1, b1, w2, b2, Dp, Hp):
    """Pad to lane-dense shapes + cast weights to bf16 (hoisted, done once)."""
    D = w1.shape[0]
    H = w1.shape[1]
    f32, bf16 = jnp.float32, jnp.bfloat16
    g2 = gamma.reshape(1, D).astype(f32)
    be2 = beta.reshape(1, D).astype(f32)
    b1p = b1.reshape(1, H).astype(f32)
    b2p = b2.reshape(1, D).astype(f32)
    w1p = w1.astype(bf16)
    w2p = w2.astype(bf16)
    if Dp != D or Hp != H:
        g2 = jnp.pad(g2, ((0, 0), (0, Dp - D)))
        be2 = jnp.pad(be2, ((0, 0), (0, Dp - D)))
        b1p = jnp.pad(b1p, ((0, 0), (0, Hp - H)))
        b2p = jnp.pad(b2p, ((0, 0), (0, Dp - D)))
        w1p = jnp.pad(w1p, ((0, Dp - D), (0, Hp - H)))
        w2p = jnp.pad(w2p, ((0, Hp - H), (0, Dp - D)))
    return g2, be2, w1p, b1p, w2p, b2p


def _apply_ffn(x, packed, D, H, plan, out_dtype):
    g2, be2, w1p, b1p, w2p, b2p = packed
    Dp, Hp = plan["Dp"], plan["Hp"]
    if x.ndim != 3 or x.shape[-1] != D:
        raise ValueError(f"expected (batch, time, {D}) input, got {x.shape}")
    B, T, _ = x.shape
    M = B * T
    out_dtype = out_dtype or x.dtype
    x_bytes = jnp.dtype(x.dtype).itemsize
    out_bytes = jnp.dtype(out_dtype).itemsize

    # Row tile: full 128-row MXU multiples when possible, 8-multiples otherwise.
    tm = min(plan["tm"], _round_up(M, 8))
    tm = (tm // 128) * 128 if tm >= 128 else _round_up(tm, 8)
    Mp = _round_up(M, tm)

    x2 = x.reshape(M, D)               # native dtype: no wrapper f32 upcast
    if Mp != M or Dp != D:
        # TODO(synk): the ragged last row tile could be masked in-kernel
        # instead of materializing a padded copy (only hit when unaligned).
        x2 = jnp.pad(x2, ((0, Mp - M), (0, Dp - D)))

    f32, bf16 = jnp.float32, jnp.bfloat16

    if plan["resident"]:
        grid = (Mp // tm,)
        in_specs = [
            pl.BlockSpec((tm, Dp), lambda i: (i, 0)),   # x rows
            pl.BlockSpec((1, Dp), lambda i: (0, 0)),    # gamma
            pl.BlockSpec((1, Dp), lambda i: (0, 0)),    # beta
            pl.BlockSpec((Dp, Hp), lambda i: (0, 0)),   # W1 (resident, bf16)
            pl.BlockSpec((1, Hp), lambda i: (0, 0)),    # b1
            pl.BlockSpec((Hp, Dp), lambda i: (0, 0)),   # W2 (resident, bf16)
            pl.BlockSpec((1, Dp), lambda i: (0, 0)),    # b2
        ]
        out_specs = pl.BlockSpec((tm, Dp), lambda i: (i, 0))
        scratch_shapes = []
        dims = ("parallel",)
        kernel = functools.partial(_ffn_resident_kernel, d_true=D)
        vmem_bytes = (2 * tm * Dp * x_bytes + 2 * tm * Dp * out_bytes
                      + 2 * (Dp * Hp + Hp * Dp) * 2
                      + 2 * (Hp + 3 * Dp) * 4
                      + tm * Hp * 4 + tm * Dp * 8)
        weight_traffic = (D * H + H * D) * 2            # DMA'd once
    else:
        th = plan["th"]
        grid = (Mp // tm, Hp // th)
        in_specs = [
            pl.BlockSpec((tm, Dp), lambda i, k: (i, 0)),   # x rows
            pl.BlockSpec((1, Dp), lambda i, k: (0, 0)),    # gamma
            pl.BlockSpec((1, Dp), lambda i, k: (0, 0)),    # beta
            pl.BlockSpec((Dp, th), lambda i, k: (0, k)),   # W1 tile (bf16)
            pl.BlockSpec((1, th), lambda i, k: (0, k)),    # b1 tile
            pl.BlockSpec((th, Dp), lambda i, k: (k, 0)),   # W2 tile (bf16)
            pl.BlockSpec((1, Dp), lambda i, k: (0, 0)),    # b2
        ]
        out_specs = pl.BlockSpec((tm, Dp), lambda i, k: (i, 0))
        scratch_shapes = [pltpu.VMEM((tm, Dp), bf16),    # cached post-LN acts
                          pltpu.VMEM((tm, Dp), f32)]     # output accumulator
        dims = ("parallel", "arbitrary")
        kernel = functools.partial(_ffn_tiled_kernel, d_true=D)
        vmem_bytes = (2 * tm * Dp * x_bytes + 2 * tm * Dp * out_bytes
                      + 2 * (Dp * th + th * Dp) * 2
                      + 2 * (th + 3 * Dp) * 4
                      + tm * Dp * 2 + tm * Dp * 4 + tm * th * 4)
        weight_traffic = (Mp // tm) * (D * H + H * D) * 2   # re-streamed per row tile

    vmem_limit = int(min(max(int(vmem_bytes * 1.25) + (2 << 20), 8 << 20),
                         plan["cap_target"]))

    cost = pl.CostEstimate(
        flops=int(4 * M * D * H),                 # two matmuls
        transcendentals=int(M * H),               # sigmoid
        bytes_accessed=int(M * D * x_bytes + M * D * out_bytes
                           + weight_traffic + (H + 3 * D) * 4),
    )

    out2 = pl.pallas_call(
        kernel,
        out_shape=jax.ShapeDtypeStruct((Mp, Dp), out_dtype),
        grid_spec=pltpu.PrefetchScalarGridSpec(
            num_scalar_prefetch=0,
            grid=grid,
            in_specs=in_specs,
            out_specs=out_specs,
            scratch_shapes=scratch_shapes,
        ),
        compiler_params=pltpu.CompilerParams(
            dimension_semantics=dims,
            vmem_limit_bytes=vmem_limit,
        ),
        cost_estimate=cost,
    )(x2, g2, be2, w1p, b1p, w2p, b2p)

    if Mp != M or Dp != D:
        out2 = out2[:M, :D]
    return out2.reshape(B, T, D)


def make_feed_forward(gamma, beta, w1, b1, w2, b2, *, row_tile=None,
                      hidden_tile=None, out_dtype=None):
    """Pack/pad parameters once (hoisted out of the per-call path) and return
    a callable x -> FFN(x).  x: (B, T, D)."""
    D, H = w1.shape
    plan = _plan(D, H, row_tile, hidden_tile)
    packed = _pack_params(gamma, beta, w1, b1, w2, b2, plan["Dp"], plan["Hp"])

    def apply(x):
        return _apply_ffn(x, packed, D, H, plan, out_dtype)

    return apply


def feed_forward_module(x, gamma, beta, w1, b1, w2, b2, **kwargs):
    """One-shot convenience wrapper (packs parameters per call)."""
    return make_feed_forward(gamma, beta, w1, b1, w2, b2, **kwargs)(x)


def _reference(x, gamma, beta, w1, b1, w2, b2):
    """Pure-JAX reference mirroring the kernel's bf16-operand / f32-accum math."""
    x = x.astype(jnp.float32)
    mean = jnp.mean(x, axis=-1, keepdims=True)
    var = jnp.mean((x - mean) ** 2, axis=-1, keepdims=True)
    xn = (x - mean) * jax.lax.rsqrt(var + 1e-5) * gamma + beta
    xn = xn.astype(jnp.bfloat16).astype(jnp.float32)
    h = xn @ w1.astype(jnp.bfloat16).astype(jnp.float32) + b1
    h = h * jax.nn.sigmoid(h)
    h = h.astype(jnp.bfloat16).astype(jnp.float32)
    return h @ w2.astype(jnp.bfloat16).astype(jnp.float32) + b2


if __name__ == "__main__":
    # Small shapes consistent with the module's (batch, time, dim) input.
    B, T, D = 2, 8, 32
    expansion = 4
    H = D * expansion

    key = jax.random.PRNGKey(0)
    kx, k1, k2, k3, k4 = jax.random.split(key, 5)

    x = jax.random.normal(kx, (B, T, D), dtype=jnp.float32)

    # Deterministic param init (LN affine = identity; Linear ~ U[-1/sqrt(fan_in), ...]).
    gamma = jnp.ones((D,), jnp.float32)
    beta = jnp.zeros((D,), jnp.float32)
    lim1 = 1.0 / (D ** 0.5)
    lim2 = 1.0 / (H ** 0.5)
    w1 = jax.random.uniform(k1, (D, H), jnp.float32, -lim1, lim1)
    b1 = jax.random.uniform(k2, (H,), jnp.float32, -lim1, lim1)
    w2 = jax.random.uniform(k3, (H, D), jnp.float32, -lim2, lim2)
    b2 = jax.random.uniform(k4, (D,), jnp.float32, -lim2, lim2)

    ffn = make_feed_forward(gamma, beta, w1, b1, w2, b2)
    out = jax.block_until_ready(ffn(x))

    ref = _reference(x, gamma, beta, w1, b1, w2, b2)
    assert out.shape == (B, T, D)
    max_err = float(jnp.max(jnp.abs(out - ref)))
    assert jnp.allclose(out, ref, atol=2e-3, rtol=2e-3), \
        f"mismatch vs reference (max abs err {max_err})"

    print("KERNEL_OK")
</pallas_src>

<mosaic_0001>
module attributes {stable_mosaic.version = 11 : i64} {
  func.func @_ffn_resident_kernel(%arg0: i32, %arg1: memref<16x128xf32, #tpu.memory_space<vmem>>, %arg2: memref<1x128xf32, #tpu.memory_space<vmem>>, %arg3: memref<1x128xf32, #tpu.memory_space<vmem>>, %arg4: memref<128x128xbf16, #tpu.memory_space<vmem>>, %arg5: memref<1x128xf32, #tpu.memory_space<vmem>>, %arg6: memref<128x128xbf16, #tpu.memory_space<vmem>>, %arg7: memref<1x128xf32, #tpu.memory_space<vmem>>, %arg8: memref<16x128xf32, #tpu.memory_space<vmem>>) attributes {dimension_semantics = [#tpu.dimension_semantics<parallel>], iteration_bounds = array<i64: 1>, scalar_prefetch = 0 : i64, scratch_operands = 0 : i64, tpu.core_type = #tpu.core_type<tc>, window_params = [{transform_indices = @transform_0, window_bounds = array<i64: 16, 128>}, {pipeline_mode = #tpu.pipeline_mode<synchronous>, transform_indices = @transform_1, window_bounds = array<i64: 1, 128>}, {pipeline_mode = #tpu.pipeline_mode<synchronous>, transform_indices = @transform_2, window_bounds = array<i64: 1, 128>}, {pipeline_mode = #tpu.pipeline_mode<synchronous>, transform_indices = @transform_3, window_bounds = array<i64: 128, 128>}, {pipeline_mode = #tpu.pipeline_mode<synchronous>, transform_indices = @transform_4, window_bounds = array<i64: 1, 128>}, {pipeline_mode = #tpu.pipeline_mode<synchronous>, transform_indices = @transform_5, window_bounds = array<i64: 128, 128>}, {pipeline_mode = #tpu.pipeline_mode<synchronous>, transform_indices = @transform_6, window_bounds = array<i64: 1, 128>}, {transform_indices = @transform_7, window_bounds = array<i64: 16, 128>}]} {
    %c0 = arith.constant 0 : index
    %c0_0 = arith.constant 0 : index
    %0 = vector.load %arg1[%c0, %c0_0] : memref<16x128xf32, #tpu.memory_space<vmem>>, vector<16x128xf32>
    %c0_1 = arith.constant 0 : index
    %c0_2 = arith.constant 0 : index
    %1 = vector.load %arg2[%c0_1, %c0_2] : memref<1x128xf32, #tpu.memory_space<vmem>>, vector<1x128xf32>
    %c0_3 = arith.constant 0 : index
    %c0_4 = arith.constant 0 : index
    %2 = vector.load %arg3[%c0_3, %c0_4] : memref<1x128xf32, #tpu.memory_space<vmem>>, vector<1x128xf32>
    %cst = arith.constant dense<0.000000e+00> : vector<16xf32>
    %3 = vector.multi_reduction <add>, %0, %cst [1] : vector<16x128xf32> to vector<16xf32>
    %4 = vector.shape_cast %3 : vector<16xf32> to vector<16x1xf32>
    %cst_5 = arith.constant 3.125000e-02 : f32
    %5 = vector.broadcast %cst_5 : f32 to vector<16x1xf32>
    %6 = arith.mulf %4, %5 : vector<16x1xf32>
    %7 = vector.broadcast %6 : vector<16x1xf32> to vector<16x128xf32>
    %8 = arith.subf %0, %7 : vector<16x128xf32>
    %9 = tpu.iota {dimensions = array<i32: 1>} : vector<16x128xi32>
    %c32_i32 = arith.constant 32 : i32
    %10 = vector.broadcast %c32_i32 : i32 to vector<16x128xi32>
    %11 = arith.cmpi slt, %9, %10 : vector<16x128xi32>
    %cst_6 = arith.constant 0.000000e+00 : f32
    %12 = vector.broadcast %cst_6 : f32 to vector<16x128xf32>
    %13 = arith.select %11, %8, %12 : vector<16x128xi1>, vector<16x128xf32>
    %14 = arith.mulf %13, %13 : vector<16x128xf32>
    %cst_7 = arith.constant dense<0.000000e+00> : vector<16xf32>
    %15 = vector.multi_reduction <add>, %14, %cst_7 [1] : vector<16x128xf32> to vector<16xf32>
    %16 = vector.shape_cast %15 : vector<16xf32> to vector<16x1xf32>
    %cst_8 = arith.constant 3.125000e-02 : f32
    %17 = vector.broadcast %cst_8 : f32 to vector<16x1xf32>
    %18 = arith.mulf %16, %17 : vector<16x1xf32>
    %cst_9 = arith.constant 9.99999974E-6 : f32
    %19 = vector.broadcast %cst_9 : f32 to vector<16x1xf32>
    %20 = arith.addf %18, %19 : vector<16x1xf32>
    %21 = math.rsqrt %20 : vector<16x1xf32>
    %22 = vector.broadcast %21 : vector<16x1xf32> to vector<16x128xf32>
    %23 = arith.mulf %13, %22 : vector<16x128xf32>
    %24 = vector.broadcast %1 : vector<1x128xf32> to vector<16x128xf32>
    %25 = arith.mulf %23, %24 : vector<16x128xf32>
    %26 = vector.broadcast %2 : vector<1x128xf32> to vector<16x128xf32>
    %27 = arith.addf %25, %26 : vector<16x128xf32>
    %28 = arith.truncf %27 : vector<16x128xf32> to vector<16x128xbf16>
    %c0_10 = arith.constant 0 : index
    %c0_11 = arith.constant 0 : index
    %29 = vector.load %arg4[%c0_10, %c0_11] : memref<128x128xbf16, #tpu.memory_space<vmem>>, vector<128x128xbf16>
    %cst_12 = arith.constant dense<0.000000e+00> : vector<16x128xf32>
    %30 = tpu.matmul %28, %29, %cst_12 {dimension_numbers = #tpu.dot_dimension_numbers<[1], [0], [0], [1], [0, 0, 1, 1], [], []>} : vector<16x128xbf16>, vector<128x128xbf16>, vector<16x128xf32> -> vector<16x128xf32>
    %c0_13 = arith.constant 0 : index
    %c0_14 = arith.constant 0 : index
    %31 = vector.load %arg5[%c0_13, %c0_14] : memref<1x128xf32, #tpu.memory_space<vmem>>, vector<1x128xf32>
    %32 = vector.broadcast %31 : vector<1x128xf32> to vector<16x128xf32>
    %33 = arith.addf %30, %32 : vector<16x128xf32>
    %34 = arith.negf %33 : vector<16x128xf32>
    %35 = math.exp %34 : vector<16x128xf32>
    %cst_15 = arith.constant 1.000000e+00 : f32
    %36 = vector.broadcast %cst_15 : f32 to vector<16x128xf32>
    %37 = arith.addf %36, %35 : vector<16x128xf32>
    %38 = arith.divf %36, %37 : vector<16x128xf32>
    %39 = arith.mulf %33, %38 : vector<16x128xf32>
    %40 = arith.truncf %39 : vector<16x128xf32> to vector<16x128xbf16>
    %c0_16 = arith.constant 0 : index
    %c0_17 = arith.constant 0 : index
    %41 = vector.load %arg6[%c0_16, %c0_17] : memref<128x128xbf16, #tpu.memory_space<vmem>>, vector<128x128xbf16>
    %cst_18 = arith.constant dense<0.000000e+00> : vector<16x128xf32>
    %42 = tpu.matmul %40, %41, %cst_18 {dimension_numbers = #tpu.dot_dimension_numbers<[1], [0], [0], [1], [0, 0, 1, 1], [], []>} : vector<16x128xbf16>, vector<128x128xbf16>, vector<16x128xf32> -> vector<16x128xf32>
    %c0_19 = arith.constant 0 : index
    %c0_20 = arith.constant 0 : index
    %43 = vector.load %arg7[%c0_19, %c0_20] : memref<1x128xf32, #tpu.memory_space<vmem>>, vector<1x128xf32>
    %44 = vector.broadcast %43 : vector<1x128xf32> to vector<16x128xf32>
    %45 = arith.addf %42, %44 : vector<16x128xf32>
    %c0_21 = arith.constant 0 : index
    %c0_22 = arith.constant 0 : index
    %46 = vector.load %arg8[%c0_21, %c0_22] : memref<16x128xf32, #tpu.memory_space<vmem>>, vector<16x128xf32>
    tpu.vector_store %arg8[%c0_21, %c0_22], %45 {strides = array<i32>} : memref<16x128xf32, #tpu.memory_space<vmem>>, vector<16x128xf32>,
    return
  }
  func.func @transform_0(%arg0: i32) -> (i32, i32) {
    %c0_i32 = arith.constant 0 : i32
    %c0_i32_0 = arith.constant 0 : i32
    return %arg0, %c0_i32 : i32, i32
  }
  func.func @transform_1(%arg0: i32) -> (i32, i32) {
    %c0_i32 = arith.constant 0 : i32
    %c0_i32_0 = arith.constant 0 : i32
    %c0_i32_1 = arith.constant 0 : i32
    return %c0_i32, %c0_i32_0 : i32, i32
  }
  func.func @transform_2(%arg0: i32) -> (i32, i32) {
    %c0_i32 = arith.constant 0 : i32
    %c0_i32_0 = arith.constant 0 : i32
    %c0_i32_1 = arith.constant 0 : i32
    return %c0_i32, %c0_i32_0 : i32, i32
  }
  func.func @transform_3(%arg0: i32) -> (i32, i32) {
    %c0_i32 = arith.constant 0 : i32
    %c0_i32_0 = arith.constant 0 : i32
    %c0_i32_1 = arith.constant 0 : i32
    return %c0_i32, %c0_i32_0 : i32, i32
  }
  func.func @transform_4(%arg0: i32) -> (i32, i32) {
    %c0_i32 = arith.constant 0 : i32
    %c0_i32_0 = arith.constant 0 : i32
    %c0_i32_1 = arith.constant 0 : i32
    return %c0_i32, %c0_i32_0 : i32, i32
  }
  func.func @transform_5(%arg0: i32) -> (i32, i32) {
    %c0_i32 = arith.constant 0 : i32
    %c0_i32_0 = arith.constant 0 : i32
    %c0_i32_1 = arith.constant 0 : i32
    return %c0_i32, %c0_i32_0 : i32, i32
  }
  func.func @transform_6(%arg0: i32) -> (i32, i32) {
    %c0_i32 = arith.constant 0 : i32
    %c0_i32_0 = arith.constant 0 : i32
    %c0_i32_1 = arith.constant 0 : i32
    return %c0_i32, %c0_i32_0 : i32, i32
  }
  func.func @transform_7(%arg0: i32) -> (i32, i32) {
    %c0_i32 = arith.constant 0 : i32
    %c0_i32_0 = arith.constant 0 : i32
    return %arg0, %c0_i32 : i32, i32
  }
}

</mosaic_0001>

<llo_original>
// kernel: tpu_custom_call.1
$region0: #{tpu_custom_call.1}
  #allocation0 [shape = 'u32[]', space=smem, size = 0x4, offset = 0x4, fixed_abs, tag = 'smem constant byte address 0x4 - core index']
  #allocation1 [shape = 'u32[144,128]{1,0:T(1,128)}', space=vmem, size = 0x12000, scoped, tag = 'internal scratch']
  %s0 = inlined_call_operand.hbm [shape: f32[16,128], index: 0, kind: input, shape index: {}]
  %s1 = inlined_call_operand.vmem [shape: f32[1,128], index: 1, kind: input, shape index: {}]
  %s2 = inlined_call_operand.vmem [shape: f32[1,128], index: 2, kind: input, shape index: {}]
  %s3 = inlined_call_operand.hbm [shape: bf16[128,128], index: 3, kind: input, shape index: {}]
  %s4 = inlined_call_operand.vmem [shape: f32[1,128], index: 4, kind: input, shape index: {}]
  %s5 = inlined_call_operand.hbm [shape: bf16[128,128], index: 5, kind: input, shape index: {}]
  %s6 = inlined_call_operand.vmem [shape: f32[1,128], index: 6, kind: input, shape index: {}]
  %s7 = inlined_call_operand.hbm [shape: f32[16,128], index: 7, kind: output, shape index: {}]
  %s8 = sld [smem:[#allocation0]]
  $region50: #{tpu_custom_call.1} parent=0
    _
  %s10 = ssub.s32 1, %s8
  %s11 = scalar_select 0, %s10, %s8
  $region1: #{tpu_custom_call.1} parent=0
    #allocation2 [shape = 'u8[8192]{0}', space=vmem, size = 0x2000, scoped, tag = 'input window, operand 0, single buffered']
    #allocation3 [shape = 's32[1]{0}', space=sflag, size = 0x4, scoped, tag = 'scoped memory for tpu_custom_call.1']
    #allocation4 [shape = 's32[1]{0}', space=sflag, size = 0x4, scoped, tag = 'scoped memory for tpu_custom_call.1']
    #allocation5 [shape = 'u8[32768]{0}', space=vmem, size = 0x8000, scoped, tag = 'input window, operand 3, single buffered']
    #allocation6 [shape = 's32[1]{0}', space=sflag, size = 0x4, scoped, tag = 'scoped memory for tpu_custom_call.1']
    #allocation7 [shape = 'u8[32768]{0}', space=vmem, size = 0x8000, scoped, tag = 'input window, operand 5, single buffered']
    #allocation8 [shape = 'u8[8192]{0}', space=vmem, size = 0x2000, scoped, tag = 'output window, operand 0, single buffered']
    %12 = vsyncpa [#allocation3], 0
    %13 = vsyncpa [#allocation6], 0
    %14 = vsyncpa [#allocation4], 0
    // Predicated region
    $region2: #{tpu_custom_call.1} parent=1 // pred_check
      _
    $region3: #{tpu_custom_call.1} parent=1 // pred_check_branch
      %16 = sbr.rel (0) target = $region5
    $region4: #{tpu_custom_call.1} parent=1 // pred_region
      %s18 = ssub.s32 256, 256
      %19 = vsyncadd [#allocation3], %s18
      %s20 = sshll.u32 [#allocation2], 4
      %s21 = int_to_ptr.vmem [resolvable:$true] %s20
      %26 = dma.hbm_to_vmem [thread:$0]  %s0, 256, %s21, [#allocation3], 128, 128, 8
    $region5: #{tpu_custom_call.1} parent=1 // pred_fallthru
      _
    // Predicated region
    $region6: #{tpu_custom_call.1} parent=1 // pred_check
      _
    $region7: #{tpu_custom_call.1} parent=1 // pred_check_branch
      %28 = sbr.rel (0) target = $region9
    $region8: #{tpu_custom_call.1} parent=1 // pred_region
      _
    $region9: #{tpu_custom_call.1} parent=1 // pred_fallthru
      _
    // Predicated region
    $region10: #{tpu_custom_call.1} parent=1 // pred_check
      _
    $region11: #{tpu_custom_call.1} parent=1 // pred_check_branch
      %30 = sbr.rel (0) target = $region13
    $region12: #{tpu_custom_call.1} parent=1 // pred_region
      _
    $region13: #{tpu_custom_call.1} parent=1 // pred_fallthru
      _
    // Predicated region
    $region14: #{tpu_custom_call.1} parent=1 // pred_check
      _
    $region15: #{tpu_custom_call.1} parent=1 // pred_check_branch
      %32 = sbr.rel (0) target = $region17
    $region16: #{tpu_custom_call.1} parent=1 // pred_region
      %s34 = ssub.s32 1024, 1024
      %35 = vsyncadd [#allocation6], %s34
      %s36 = sshll.u32 [#allocation5], 4
      %s37 = int_to_ptr.vmem [resolvable:$true] %s36
      %42 = dma.hbm_to_vmem [thread:$0]  %s3, 1024, %s37, [#allocation6], 64, 64, 4
    $region17: #{tpu_custom_call.1} parent=1 // pred_fallthru
      _
    // Predicated region
    $region18: #{tpu_custom_call.1} parent=1 // pred_check
      _
    $region19: #{tpu_custom_call.1} parent=1 // pred_check_branch
      %44 = sbr.rel (0) target = $region21
    $region20: #{tpu_custom_call.1} parent=1 // pred_region
      _
    $region21: #{tpu_custom_call.1} parent=1 // pred_fallthru
      _
    // Predicated region
    $region22: #{tpu_custom_call.1} parent=1 // pred_check
      _
    $region23: #{tpu_custom_call.1} parent=1 // pred_check_branch
      %46 = sbr.rel (0) target = $region25
    $region24: #{tpu_custom_call.1} parent=1 // pred_region
      %s48 = ssub.s32 1024, 1024
      %49 = vsyncadd [#allocation6], %s48
      %s50 = sshll.u32 [#allocation7], 4
      %s51 = int_to_ptr.vmem [resolvable:$true] %s50
      %56 = dma.hbm_to_vmem [thread:$0]  %s5, 1024, %s51, [#allocation6], 64, 64, 4
    $region25: #{tpu_custom_call.1} parent=1 // pred_fallthru
      _
    // Predicated region
    $region26: #{tpu_custom_call.1} parent=1 // pred_check
      _
    $region27: #{tpu_custom_call.1} parent=1 // pred_check_branch
      %58 = sbr.rel (0) target = $region29
    $region28: #{tpu_custom_call.1} parent=1 // pred_region
      _
    $region29: #{tpu_custom_call.1} parent=1 // pred_fallthru
      _
    // Predicated region
    $region30: #{tpu_custom_call.1} parent=1 // pred_check
      _
    $region31: #{tpu_custom_call.1} parent=1 // pred_check_branch
      %60 = sbr.rel (0) target = $region33
    $region32: #{tpu_custom_call.1} parent=1 // pred_region
      %61 = dma.done [#allocation3], 256
    $region33: #{tpu_custom_call.1} parent=1 // pred_fallthru
      _
    // Predicated region
    $region34: #{tpu_custom_call.1} parent=1 // pred_check
      _
    $region35: #{tpu_custom_call.1} parent=1 // pred_check_branch
      %63 = sbr.rel (0) target = $region37
    $region36: #{tpu_custom_call.1} parent=1 // pred_region
      %64 = dma.done [#allocation6], 1024
    $region37: #{tpu_custom_call.1} parent=1 // pred_fallthru
      _
    // Predicated region
    $region38: #{tpu_custom_call.1} parent=1 // pred_check
      _
    $region39: #{tpu_custom_call.1} parent=1 // pred_check_branch
      %66 = sbr.rel (0) target = $region41
    $region40: #{tpu_custom_call.1} parent=1 // pred_region
      %67 = dma.done [#allocation6], 1024
    $region41: #{tpu_custom_call.1} parent=1 // pred_fallthru
      _
    %v69 = vld [vmem:[#allocation2] sm:$0xff]
    %v70 = vld [vmem:[#allocation2 + $0x8] sm:$0xff]
    %v71 = vld [vmem:[%s1] sm:$0x1]
    %v72 = vld [vmem:[%s2] sm:$0x1]
    %73 = vadd.xlane.f32.xlu0 %v69
    %v74 = vpop.xlane.xlu0 %73
    %75 = vadd.xlane.f32.xlu0 %v70
    %v76 = vpop.xlane.xlu0 %75
    %v77 = vmul.f32 %v74, 0.03125
    %v78 = vmul.f32 %v76, 0.03125
    %v79 = vsub.f32 %v69, %v77
    %v80 = vsub.f32 %v70, %v78
    %v81 = vlaneseq
    %v82 = vand.u32 %v81, 127
    %vm83 = vcmp.lt.s32.totalorder %v82, 32
    %v84 = vsel %vm83, %v79, 0.0
    %v85 = vsel %vm83, %v80, 0.0
    %v86 = vmul.f32 %v84, %v84
    %v87 = vmul.f32 %v85, %v85
    %88 = vadd.xlane.f32.xlu0 %v86
    %v89 = vpop.xlane.xlu0 %88
    %90 = vadd.xlane.f32.xlu0 %v87
    %v91 = vpop.xlane.xlu0 %90
    %v92 = vmul.f32 %v89, 0.03125
    %v93 = vmul.f32 %v91, 0.03125
    %v94 = vadd.f32 %v92, 1e-05
    %v95 = vadd.f32 %v93, 1e-05
    %v96 = vrsqrt.pop %v94
    %v97 = vrsqrt.pop %v95
    %v98 = vmul.f32 %v84, %v96
    %v99 = vmul.f32 %v85, %v97
    %v101 = vlaneseq
    %v102 = vshrl.u32 %v101, 7
    %v103 = vsub.s32 0, %v102
    %v104 = vrot.slane %v71, %v103
    %v106 = vmul.f32 %v98, %v104
    %v107 = vmul.f32 %v99, %v104
    %v109 = vlaneseq
    %v110 = vshrl.u32 %v109, 7
    %v111 = vsub.s32 0, %v110
    %v112 = vrot.slane %v72, %v111
    %v114 = vadd.f32 %v106, %v112
    %v115 = vadd.f32 %v107, %v112
    %v116 = vpack.c.bf16 %v115, %v114
    %v117 = vld [vmem:[#allocation5] sm:$0xf]
    %v118 = vld [vmem:[#allocation5 + $0x4] sm:$0xf]
    %v119 = vld [vmem:[#allocation5 + $0x8] sm:$0xf]
    %v120 = vld [vmem:[#allocation5 + $0xc] sm:$0xf]
    %v121 = vld [vmem:[#allocation5 + $0x10] sm:$0xf]
    %v122 = vld [vmem:[#allocation5 + $0x14] sm:$0xf]
    %v123 = vld [vmem:[#allocation5 + $0x18] sm:$0xf]
    %v124 = vld [vmem:[#allocation5 + $0x1c] sm:$0xf]
    %v125 = vld [vmem:[#allocation5 + $0x20] sm:$0xf]
    %v126 = vld [vmem:[#allocation5 + $0x24] sm:$0xf]
    %v127 = vld [vmem:[#allocation5 + $0x28] sm:$0xf]
    %v128 = vld [vmem:[#allocation5 + $0x2c] sm:$0xf]
    %v129 = vld [vmem:[#allocation5 + $0x30] sm:$0xf]
    %v130 = vld [vmem:[#allocation5 + $0x34] sm:$0xf]
    %v131 = vld [vmem:[#allocation5 + $0x38] sm:$0xf]
    %v132 = vld [vmem:[#allocation5 + $0x3c] sm:$0xf]
    %v133 = vld [vmem:[%s4] sm:$0x1]
    %v135 = vlaneseq
    %v136 = vshrl.u32 %v135, 7
    %v137 = vsub.s32 0, %v136
    %v138 = vrot.slane %v133, %v137
    %v156 = vunpack.c.l.b16 %v117
    %v157 = vunpack.c.l.b16 %v118
    %v158 = vunpack.c.l.b16 %v119
    %v159 = vunpack.c.l.b16 %v120
    %v160 = vunpack.c.l.b16 %v121
    %v161 = vunpack.c.l.b16 %v122
    %v162 = vunpack.c.l.b16 %v123
    %v163 = vunpack.c.l.b16 %v124
    %v164 = vunpack.c.l.b16 %v125
    %v165 = vunpack.c.l.b16 %v126
    %v166 = vunpack.c.l.b16 %v127
    %v167 = vunpack.c.l.b16 %v128
    %v168 = vunpack.c.l.b16 %v129
    %v169 = vunpack.c.l.b16 %v130
    %v170 = vunpack.c.l.b16 %v131
    %v171 = vunpack.c.l.b16 %v132
    %v172 = vpack.c.b16 %v157, %v156
    %v173 = vpack.c.b16 %v159, %v158
    %v174 = vpack.c.b16 %v161, %v160
    %v175 = vpack.c.b16 %v163, %v162
    %v176 = vpack.c.b16 %v165, %v164
    %v177 = vpack.c.b16 %v167, %v166
    %v178 = vpack.c.b16 %v169, %v168
    %v179 = vpack.c.b16 %v171, %v170
    %188 = vmatprep.subr.bf16.mxu0 0
    %189 = vmatpush1.bf16.msra.mxu0 %v179
    %190 = vmatprep.subr.bf16.mxu0 0
    %191 = vmatpush1.bf16.msra.mxu0 %v178
    %192 = vmatprep.subr.bf16.mxu0 0
    %193 = vmatpush1.bf16.msra.mxu0 %v177
    %194 = vmatprep.subr.bf16.mxu0 0
    %195 = vmatpush1.bf16.msra.mxu0 %v176
    %196 = vmatprep.subr.bf16.mxu0 0
    %197 = vmatpush1.bf16.msra.mxu0 %v175
    %198 = vmatprep.subr.bf16.mxu0 0
    %199 = vmatpush1.bf16.msra.mxu0 %v174
    %200 = vmatprep.subr.bf16.mxu0 0
    %201 = vmatpush1.bf16.msra.mxu0 %v173
    %202 = vmatprep.subr.bf16.mxu0 0
    %203 = vmatpush1.bf16.msra.mxu0 %v172
    %204 = vmatprep.subr.bf16.mxu0 0
    %205 = vmatpush2.bf16.msra.mxu0 0
    %206 = vmatprep.subr.bf16.mxu0 0
    %207 = vmatpush2.bf16.msra.mxu0 0
    %208 = vmatprep.subr.bf16.mxu0 0
    %209 = vmatpush2.bf16.msra.mxu0 0
    %210 = vmatprep.subr.bf16.mxu0 0
    %211 = vmatpush2.bf16.msra.mxu0 0
    %212 = vmatprep.subr.bf16.mxu0 0
    %213 = vmatpush2.bf16.msra.mxu0 0
    %214 = vmatprep.subr.bf16.mxu0 0
    %215 = vmatpush2.bf16.msra.mxu0 0
    %216 = vmatprep.subr.bf16.mxu0 0
    %217 = vmatpush2.bf16.msra.mxu0 0
    %218 = vmatprep.subr.bf16.mxu0 0
    %219 = vmatpush2.bf16.msra.mxu0 0
    %220 = vmatprep.mubr.bf16.mxu0 0
    %221 = vmatmul.mubr.bf16.gmra.mxu0 %v116
    %v222 = vpop.f32.mrf.mxu0
    %v223 = vadd.f32 %v138, %v222
    %v224 = vpop.f32.mrf.mxu0
    %v225 = vpop.f32.mrf.mxu0
    %v226 = vadd.f32 %v138, %v225
    %v227 = vpop.f32.mrf.mxu0
    %228 = vdwg.mxu0
    %v229 = vxor.u32 %v223, 2147483648
    %v230 = vxor.u32 %v226, 2147483648
    %v231 = vmul.f32 %v229, 1.442695
    %v232 = vpow.pop %v231
    %v233 = vmul.f32 %v230, 1.442695
    %v234 = vpow.pop %v233
    %v235 = vadd.f32 %v232, 1.0
    %v236 = vadd.f32 %v234, 1.0
    %v237 = vrcp.pop %v235
    %v238 = vmul.f32 1.0, %v237
    %v239 = vrcp.pop %v236
    %v240 = vmul.f32 1.0, %v239
    %v241 = vmul.f32 %v223, %v238
    %v242 = vmul.f32 %v226, %v240
    %v243 = vpack.c.bf16 %v242, %v241
    %v244 = vld [vmem:[#allocation7] sm:$0xf]
    %v245 = vld [vmem:[#allocation7 + $0x4] sm:$0xf]
    %v246 = vld [vmem:[#allocation7 + $0x8] sm:$0xf]
    %v247 = vld [vmem:[#allocation7 + $0xc] sm:$0xf]
    %v248 = vld [vmem:[#allocation7 + $0x10] sm:$0xf]
    %v249 = vld [vmem:[#allocation7 + $0x14] sm:$0xf]
    %v250 = vld [vmem:[#allocation7 + $0x18] sm:$0xf]
    %v251 = vld [vmem:[#allocation7 + $0x1c] sm:$0xf]
    %v252 = vld [vmem:[#allocation7 + $0x20] sm:$0xf]
    %v253 = vld [vmem:[#allocation7 + $0x24] sm:$0xf]
    %v254 = vld [vmem:[#allocation7 + $0x28] sm:$0xf]
    %v255 = vld [vmem:[#allocation7 + $0x2c] sm:$0xf]
    %v256 = vld [vmem:[#allocation7 + $0x30] sm:$0xf]
    %v257 = vld [vmem:[#allocation7 + $0x34] sm:$0xf]
    %v258 = vld [vmem:[#allocation7 + $0x38] sm:$0xf]
    %v259 = vld [vmem:[#allocation7 + $0x3c] sm:$0xf]
    %v260 = vld [vmem:[%s6] sm:$0x1]
    %v262 = vlaneseq
    %v263 = vshrl.u32 %v262, 7
    %v264 = vsub.s32 0, %v263
    %v265 = vrot.slane %v260, %v264
    %v283 = vunpack.c.l.b16 %v244
    %v284 = vunpack.c.l.b16 %v245
    %v285 = vunpack.c.l.b16 %v246
    %v286 = vunpack.c.l.b16 %v247
    %v287 = vunpack.c.l.b16 %v248
    %v288 = vunpack.c.l.b16 %v249
    %v289 = vunpack.c.l.b16 %v250
    %v290 = vunpack.c.l.b16 %v251
    %v291 = vunpack.c.l.b16 %v252
    %v292 = vunpack.c.l.b16 %v253
    %v293 = vunpack.c.l.b16 %v254
    %v294 = vunpack.c.l.b16 %v255
    %v295 = vunpack.c.l.b16 %v256
    %v296 = vunpack.c.l.b16 %v257
    %v297 = vunpack.c.l.b16 %v258
    %v298 = vunpack.c.l.b16 %v259
    %v299 = vpack.c.b16 %v284, %v283
    %v300 = vpack.c.b16 %v286, %v285
    %v301 = vpack.c.b16 %v288, %v287
    %v302 = vpack.c.b16 %v290, %v289
    %v303 = vpack.c.b16 %v292, %v291
    %v304 = vpack.c.b16 %v294, %v293
    %v305 = vpack.c.b16 %v296, %v295
    %v306 = vpack.c.b16 %v298, %v297
    %315 = vmatprep.subr.bf16.mxu0 0
    %316 = vmatpush1.bf16.msra.mxu0 %v306
    %317 = vmatprep.subr.bf16.mxu0 0
    %318 = vmatpush1.bf16.msra.mxu0 %v305
    %319 = vmatprep.subr.bf16.mxu0 0
    %320 = vmatpush1.bf16.msra.mxu0 %v304
    %321 = vmatprep.subr.bf16.mxu0 0
    %322 = vmatpush1.bf16.msra.mxu0 %v303
    %323 = vmatprep.subr.bf16.mxu0 0
    %324 = vmatpush1.bf16.msra.mxu0 %v302
    %325 = vmatprep.subr.bf16.mxu0 0
    %326 = vmatpush1.bf16.msra.mxu0 %v301
    %327 = vmatprep.subr.bf16.mxu0 0
    %328 = vmatpush1.bf16.msra.mxu0 %v300
    %329 = vmatprep.subr.bf16.mxu0 0
    %330 = vmatpush1.bf16.msra.mxu0 %v299
    %331 = vmatprep.subr.bf16.mxu0 0
    %332 = vmatpush2.bf16.msra.mxu0 0
    %333 = vmatprep.subr.bf16.mxu0 0
    %334 = vmatpush2.bf16.msra.mxu0 0
    %335 = vmatprep.subr.bf16.mxu0 0
    %336 = vmatpush2.bf16.msra.mxu0 0
    %337 = vmatprep.subr.bf16.mxu0 0
    %338 = vmatpush2.bf16.msra.mxu0 0
    %339 = vmatprep.subr.bf16.mxu0 0
    %340 = vmatpush2.bf16.msra.mxu0 0
    %341 = vmatprep.subr.bf16.mxu0 0
    %342 = vmatpush2.bf16.msra.mxu0 0
    %343 = vmatprep.subr.bf16.mxu0 0
    %344 = vmatpush2.bf16.msra.mxu0 0
    %345 = vmatprep.subr.bf16.mxu0 0
    %346 = vmatpush2.bf16.msra.mxu0 0
    %347 = vmatprep.mubr.bf16.mxu0 0
    %348 = vmatmul.mubr.bf16.gmra.mxu0 %v243
    %v349 = vpop.f32.mrf.mxu0
    %v350 = vadd.f32 %v265, %v349
    %v351 = vpop.f32.mrf.mxu0
    %v352 = vpop.f32.mrf.mxu0
    %v353 = vadd.f32 %v265, %v352
    %v354 = vpop.f32.mrf.mxu0
    %355 = vdwg.mxu0
    %356 = vst [vmem:[#allocation8] sm:$0xff] %v350
    %357 = vst [vmem:[#allocation8 + $0x8] sm:$0xff] %v353
    // Predicated region
    $region42: #{tpu_custom_call.1} parent=1 // pred_check
      _
    $region43: #{tpu_custom_call.1} parent=1 // pred_check_branch
      %359 = sbr.rel (0) target = $region45
    $region44: #{tpu_custom_call.1} parent=1 // pred_region
      %s361 = ssub.s32 256, 256
      %362 = vsyncadd [#allocation4], %s361
      %s363 = sshll.u32 [#allocation8], 4
      %s364 = int_to_ptr.vmem [resolvable:$true] %s363
      %369 = dma.vmem_to_hbm [thread:$0]  %s364, 256, %s7, [#allocation4], 128, 128, 8
    $region45: #{tpu_custom_call.1} parent=1 // pred_fallthru
      _
    // Predicated region
    $region46: #{tpu_custom_call.1} parent=1 // pred_check
      _
    $region47: #{tpu_custom_call.1} parent=1 // pred_check_branch
      %371 = sbr.rel (0) target = $region49
    $region48: #{tpu_custom_call.1} parent=1 // pred_region
      %372 = dma.done [#allocation4], 256
    $region49: #{tpu_custom_call.1} parent=1 // pred_fallthru
      _
    %373 = vsyncpa [#allocation3], 1
    %374 = vsyncpa [#allocation6], 1
    %375 = vsyncpa [#allocation4], 1

</llo_original>
